<compile_context>
chip_gen: v5e
topology: v5e:2x2
jax: 0.10.0
libtpu: 0.0.40
codegen_flags: <defaults>
</compile_context>

<pallas_src>
import functools
import math

import jax
import jax.numpy as jnp
from jax import lax
from jax.experimental import pallas as pl
from jax.experimental.pallas import tpu as pltpu


def _round_up(x: int, m: int) -> int:
    return (x + m - 1) // m * m


def _vmem_budget():
    """Generation-aware (per-step working-set budget, vmem_limit_bytes).

    ~40% of physical VMEM for the working set, ~60% for the Mosaic scoped
    limit: roughly 25/38 MiB on v7x (64 MiB per TC), 51/76 MiB on v5e/v6e
    (128 MiB)."""
    cap = 64 << 20                                # conservative fallback (v7x)
    try:
        info = pltpu.get_tpu_info()
        cap = int(getattr(info, "vmem_capacity_bytes", cap)) or cap
    except Exception:
        pass
    budget = min(int(cap * 0.40), 56 << 20)
    limit = min(int(cap * 0.60), 96 << 20)
    return budget, max(limit, budget + (4 << 20))


def _choose_tiles(B, Ld, Ls, Ls_pad, d_dest, d_qk, in_bytes, out_bytes, budget):
    """Pick (BT, TQ).  Counts ALL per-step VMEM: double-buffered I/O blocks,
    the grid-invariant weight/bias blocks, the f32 q intermediate, and the f32
    softmax temporaries over the (BT, TQ, Ls_pad) score tile (previously the
    unaccounted term that dominated for long sequences)."""

    def step_bytes(bt, tq):
        io = 2 * (bt * tq * d_dest * in_bytes        # dest tile     (x2 buffers)
                  + bt * Ls_pad * d_qk * in_bytes    # K tile        (x2 buffers)
                  + bt * tq * Ls * out_bytes)        # output tile   (x2 buffers)
        w = 2 * (d_dest * d_qk * in_bytes + d_qk * 4 + Ls_pad * 4)
        q_int = bt * tq * d_qk * (4 + in_bytes)      # f32 q + compute-dtype copy
        sm_tmp = 3 * bt * tq * Ls_pad * 4            # f32 scores / exp / probs
        return io + w + q_int + sm_tmp

    # Up to ~1024 rows per step (fills the MXU row dim, keeps the output DMA
    # streaming and amortizes the ~0.35 us/step overhead); the generation-aware
    # budget (not a fixed cap) shrinks this on v7x or for long Ls.
    tq = min(_round_up(Ld, 16), 1024)
    bt = max(1, min(B, max(1, 1024 // tq)))
    while bt > 1 and step_bytes(bt, tq) > budget:
        bt -= 1
    while tq > 16 and step_bytes(bt, tq) > budget:
        tq = max(16, _round_up(tq // 2, 16))
    return bt, tq


def _ensure_two_steps(B, Ld, bt, tq):
    """v7x shards 'parallel' grid axes over 2 TensorCores: make sure the grid
    has >= 2 steps whenever the problem can be split at all."""
    if pl.cdiv(B, bt) * pl.cdiv(Ld, tq) >= 2:
        return bt, tq
    if bt > 1:
        bt = (bt + 1) // 2
        if pl.cdiv(B, bt) * pl.cdiv(Ld, tq) >= 2:
            return bt, tq
    if tq > 16 and Ld > 16:
        tq = max(16, _round_up(pl.cdiv(tq, 2), 16))
    return bt, tq


def _qk_attention_kernel(dest_ref, k_ref, wq_ref, bq_ref, kbias_ref, out_ref, *,
                         use_softmax, apply_mask, valid_ls, compute_dtype):
    """One (batch-tile, q-tile) grid step.

    dest_ref:  (BT, TQ, d_dest)    compute_dtype
    k_ref:     (BT, Ls_pad, d_qk)  compute_dtype (pre-projected keys, zero-padded)
    wq_ref:    (d_dest, d_qk)      compute_dtype, pre-scaled by 1/sqrt(d_qk)
    bq_ref:    (1, d_qk)           f32, pre-scaled
    kbias_ref: (1, Ls_pad)         f32 additive key-padding bias (0 / -1e30)
    out_ref:   (BT, TQ, Ls)        out_dtype (last dim is the TRUE Ls, unpadded)
    """
    BT, TQ, d_dest = dest_ref.shape
    _, Ls_pad, d_qk = k_ref.shape

    # Query projection: fold the batch tile into the MXU row dimension
    # (weights are batch-shared), f32 accumulation, f32 bias add.
    xq = dest_ref[...].reshape(BT * TQ, d_dest)
    q = jnp.dot(xq, wq_ref[...], preferred_element_type=jnp.float32) + bq_ref[...]
    q = q.reshape(BT, TQ, d_qk).astype(compute_dtype)

    # scores[b] = q[b] @ k[b]^T, contracting the last dims directly (no
    # explicit transpose of k in front of the MXU); f32 accumulation.
    attn = lax.dot_general(
        q, k_ref[...],
        dimension_numbers=(((2,), (2,)), ((0,), (0,))),
        preferred_element_type=jnp.float32)

    if use_softmax:
        if apply_mask:
            # One VPU add with a precomputed 0/-1e30 bias instead of
            # iota + compare + select over the full L^2 tile.
            attn = attn + kbias_ref[...].reshape(1, 1, Ls_pad)
        m = jnp.max(attn, axis=-1, keepdims=True)
        e = jnp.exp(attn - m)
        # TODO(synk): if a bundle dump shows the EUP binding on v6e/v7x after
        # the bf16-output switch, do the exp in bf16 there (v5e EUP is f32-only).
        denom = jnp.sum(e, axis=-1, keepdims=True)
        attn = e * pl.reciprocal(denom, approx=True)

    # Static slice drops padded key columns; boundary rows/batches are dropped
    # by Pallas's clipped output writeback -> no post-kernel slice copy needed.
    out_ref[...] = attn[:, :, :valid_ls].astype(out_ref.dtype)


def query_key_attention(dest, source, wq_t, bq, wk_t, bk, *, softmax=True,
                        compute_dtype=jnp.bfloat16, out_dtype=jnp.bfloat16):
    """Pallas forward of QueryKeyAttention.

    dest: (B, L_dest, d_dest), source: (B, L_src, d_source)
    wq_t: (d_dest, d_qk), wk_t: (d_source, d_qk)  (nn.Linear weights, pre-transposed)
    bq, bk: (1, d_qk)
    Returns attn: (B, L_dest, L_src) in out_dtype (default bf16 — the kernel is
    HBM-write-bound on the L^2 output, so halving the writeback ~halves wall)."""
    B, Ld, d_dest = dest.shape
    Bs, Ls, d_source = source.shape
    assert B == Bs
    d_qk = wq_t.shape[1]
    inv_temp = 1.0 / math.sqrt(d_qk)

    # Fold 1/sqrt(d_qk) into the query projection at trace time (removes an
    # (Ld, Ls)-sized VPU scale from the kernel entirely).
    wq_s = wq_t.astype(jnp.float32) * inv_temp
    bq_s = bq.astype(jnp.float32) * inv_temp

    # Key projection computed ONCE outside the kernel (shared by all q-tiles;
    # in-kernel it would be recomputed Ld/TQ times and need a lane-sparse
    # (B, Ls, d_source) DMA per step).  f32 matmul, then cast for the MXU.
    k_full = (source.astype(jnp.float32) @ wk_t.astype(jnp.float32)
              + bk.astype(jnp.float32)).astype(compute_dtype)

    dest_c = dest.astype(compute_dtype)
    wq_c = wq_s.astype(compute_dtype)
    in_bytes = jnp.dtype(compute_dtype).itemsize
    out_bytes = jnp.dtype(out_dtype).itemsize

    # Key length padded to a lane multiple for the in-kernel score/softmax
    # tile only; the OUTPUT keeps its true Ls (no padded L^2 array to slice).
    Ls_pad = _round_up(Ls, 128)
    budget, vmem_limit = _vmem_budget()
    BT, TQ = _choose_tiles(B, Ld, Ls, Ls_pad, d_dest, d_qk,
                           in_bytes, out_bytes, budget)
    BT, TQ = _ensure_two_steps(B, Ld, BT, TQ)
    B_pad = _round_up(B, BT)
    Ld_pad = _round_up(Ld, TQ)

    # Input padding is cheap (O(B*L*d), not O(L^2)) and keeps all in-kernel
    # compute on aligned, deterministic (zero) data.
    if (B_pad, Ld_pad) != (B, Ld):
        dest_c = jnp.pad(dest_c, ((0, B_pad - B), (0, Ld_pad - Ld), (0, 0)))
    if (B_pad, Ls_pad) != (B, Ls):
        k_full = jnp.pad(k_full, ((0, B_pad - B), (0, Ls_pad - Ls), (0, 0)))

    # Grid-invariant additive key-padding bias (0 valid / -1e30 padded).
    kbias = jnp.where(jnp.arange(Ls_pad) < Ls, 0.0, -1e30).astype(jnp.float32)
    kbias = kbias.reshape(1, Ls_pad)

    kernel = functools.partial(
        _qk_attention_kernel,
        use_softmax=softmax,
        apply_mask=(softmax and Ls < Ls_pad),
        valid_ls=Ls,
        compute_dtype=compute_dtype)

    grid = (B_pad // BT, Ld_pad // TQ)

    # TODO(synk): pipeline_mode=pl.Buffered(1) on the grid-invariant wq/bq/kbias
    # blocks would reclaim their double buffers; with K projected outside they
    # total well under 64 KiB here, so it is omitted to keep lowering portable.
    out = pl.pallas_call(
        kernel,
        out_shape=jax.ShapeDtypeStruct((B, Ld, Ls), out_dtype),
        grid=grid,
        in_specs=[
            pl.BlockSpec((BT, TQ, d_dest), lambda b, i: (b, i, 0)),     # dest tile
            pl.BlockSpec((BT, Ls_pad, d_qk), lambda b, i: (b, 0, 0)),   # K (pre-projected)
            pl.BlockSpec((d_dest, d_qk), lambda b, i: (0, 0)),          # Wq^T (pre-scaled)
            pl.BlockSpec((1, d_qk), lambda b, i: (0, 0)),               # bq (pre-scaled)
            pl.BlockSpec((1, Ls_pad), lambda b, i: (0, 0)),             # key-padding bias
        ],
        out_specs=pl.BlockSpec((BT, TQ, Ls), lambda b, i: (b, i, 0)),
        compiler_params=pltpu.CompilerParams(
            dimension_semantics=("parallel", "parallel"),
            vmem_limit_bytes=vmem_limit),
    )(dest_c, k_full, wq_c, bq_s, kbias)

    return out


def _reference(dest, source, wq_t, bq, wk_t, bk, softmax=True):
    q = dest.astype(jnp.float32) @ wq_t.astype(jnp.float32) + bq
    k = source.astype(jnp.float32) @ wk_t.astype(jnp.float32) + bk
    attn = jnp.einsum("bqd,bkd->bqk", q, k) / math.sqrt(wq_t.shape[1])
    if softmax:
        attn = jax.nn.softmax(attn, axis=-1)
    return attn


if __name__ == "__main__":
    # Module config (small, consistent with the forward).
    B, L_dest, L_src = 2, 16, 8
    d_dest, d_source, d_qk = 32, 16, 32

    key = jax.random.PRNGKey(0)
    k_d, k_s, k_wq, k_bq, k_wk, k_bk = jax.random.split(key, 6)

    dest = jax.random.normal(k_d, (B, L_dest, d_dest), dtype=jnp.float32)
    source = jax.random.normal(k_s, (B, L_src, d_source), dtype=jnp.float32)

    # nn.Linear-style uniform init; weights stored pre-transposed (d_in, d_qk),
    # biases kept 2D (1, d_qk) for TPU layout.
    bound_q = 1.0 / math.sqrt(d_dest)
    bound_k = 1.0 / math.sqrt(d_source)
    wq_t = jax.random.uniform(k_wq, (d_dest, d_qk), jnp.float32, -bound_q, bound_q)
    bq = jax.random.uniform(k_bq, (1, d_qk), jnp.float32, -bound_q, bound_q)
    wk_t = jax.random.uniform(k_wk, (d_source, d_qk), jnp.float32, -bound_k, bound_k)
    bk = jax.random.uniform(k_bk, (1, d_qk), jnp.float32, -bound_k, bound_k)

    ref_sm = _reference(dest, source, wq_t, bq, wk_t, bk, softmax=True)
    ref_ns = _reference(dest, source, wq_t, bq, wk_t, bk, softmax=False)

    # Default path: bf16 MXU operands + bf16 output (HBM-write-bound kernel).
    attn_bf16 = jax.block_until_ready(
        query_key_attention(dest, source, wq_t, bq, wk_t, bk, softmax=True))
    assert attn_bf16.shape == (B, L_dest, L_src)
    assert attn_bf16.dtype == jnp.bfloat16
    assert jnp.allclose(attn_bf16.astype(jnp.float32), ref_sm, atol=2.5e-2), \
        "bf16 softmax mismatch"

    # Full-f32 path (tight tolerance; approx reciprocal only).
    attn_f32 = jax.block_until_ready(
        query_key_attention(dest, source, wq_t, bq, wk_t, bk, softmax=True,
                            compute_dtype=jnp.float32, out_dtype=jnp.float32))
    assert jnp.allclose(attn_f32, ref_sm, atol=2e-3), "f32 softmax mismatch"

    # softmax=False branch (f32 in / f32 out).
    attn_ns = jax.block_until_ready(
        query_key_attention(dest, source, wq_t, bq, wk_t, bk, softmax=False,
                            compute_dtype=jnp.float32, out_dtype=jnp.float32))
    assert jnp.allclose(attn_ns, ref_ns, atol=5e-4), "no-softmax mismatch"

    # Odd (non-tile-multiple) shapes: exercises the slice-free output path
    # (unpadded (B, Ld, Ls) output, clipped boundary writeback, key-pad bias).
    B2, Ld2, Ls2 = 3, 20, 11
    k2a, k2b = jax.random.split(jax.random.PRNGKey(1), 2)
    dest2 = jax.random.normal(k2a, (B2, Ld2, d_dest), dtype=jnp.float32)
    source2 = jax.random.normal(k2b, (B2, Ls2, d_source), dtype=jnp.float32)
    ref2 = _reference(dest2, source2, wq_t, bq, wk_t, bk, softmax=True)
    attn2 = jax.block_until_ready(
        query_key_attention(dest2, source2, wq_t, bq, wk_t, bk, softmax=True,
                            compute_dtype=jnp.float32, out_dtype=jnp.float32))
    assert attn2.shape == (B2, Ld2, Ls2)
    assert jnp.allclose(attn2, ref2, atol=2e-3), "odd-shape softmax mismatch"

    print("KERNEL_OK")
</pallas_src>

<mosaic_0001>
module attributes {stable_mosaic.version = 11 : i64} {
  func.func @_qk_attention_kernel(%arg0: i32, %arg1: i32, %arg2: memref<1x16x32xbf16, #tpu.memory_space<vmem>>, %arg3: memref<1x128x32xbf16, #tpu.memory_space<vmem>>, %arg4: memref<32x32xbf16, #tpu.memory_space<vmem>>, %arg5: memref<1x32xf32, #tpu.memory_space<vmem>>, %arg6: memref<1x128xf32, #tpu.memory_space<vmem>>, %arg7: memref<1x16x8xbf16, #tpu.memory_space<vmem>>) attributes {dimension_semantics = [#tpu.dimension_semantics<parallel>, #tpu.dimension_semantics<parallel>], iteration_bounds = array<i64: 2, 1>, scalar_prefetch = 0 : i64, scratch_operands = 0 : i64, tpu.core_type = #tpu.core_type<tc>, window_params = [{transform_indices = @transform_0, window_bounds = array<i64: 1, 16, 32>}, {transform_indices = @transform_1, window_bounds = array<i64: 1, 128, 32>}, {pipeline_mode = #tpu.pipeline_mode<synchronous>, transform_indices = @transform_2, window_bounds = array<i64: 32, 32>}, {pipeline_mode = #tpu.pipeline_mode<synchronous>, transform_indices = @transform_3, window_bounds = array<i64: 1, 32>}, {pipeline_mode = #tpu.pipeline_mode<synchronous>, transform_indices = @transform_4, window_bounds = array<i64: 1, 128>}, {transform_indices = @transform_5, window_bounds = array<i64: 1, 16, 8>}]} {
    %c0 = arith.constant 0 : index
    %c0_0 = arith.constant 0 : index
    %c0_1 = arith.constant 0 : index
    %0 = vector.load %arg2[%c0, %c0_0, %c0_1] : memref<1x16x32xbf16, #tpu.memory_space<vmem>>, vector<1x16x32xbf16>
    %1 = vector.shape_cast %0 : vector<1x16x32xbf16> to vector<16x32xbf16>
    %c0_2 = arith.constant 0 : index
    %c0_3 = arith.constant 0 : index
    %2 = vector.load %arg4[%c0_2, %c0_3] : memref<32x32xbf16, #tpu.memory_space<vmem>>, vector<32x32xbf16>
    %cst = arith.constant dense<0.000000e+00> : vector<16x32xf32>
    %3 = tpu.matmul %1, %2, %cst {dimension_numbers = #tpu.dot_dimension_numbers<[1], [0], [0], [1], [0, 0, 1, 1], [], []>} : vector<16x32xbf16>, vector<32x32xbf16>, vector<16x32xf32> -> vector<16x32xf32>
    %c0_4 = arith.constant 0 : index
    %c0_5 = arith.constant 0 : index
    %4 = vector.load %arg5[%c0_4, %c0_5] : memref<1x32xf32, #tpu.memory_space<vmem>>, vector<1x32xf32>
    %5 = vector.broadcast %4 : vector<1x32xf32> to vector<16x32xf32>
    %6 = arith.addf %3, %5 : vector<16x32xf32>
    %7 = vector.shape_cast %6 : vector<16x32xf32> to vector<1x16x32xf32>
    %8 = arith.truncf %7 : vector<1x16x32xf32> to vector<1x16x32xbf16>
    %c0_6 = arith.constant 0 : index
    %c0_7 = arith.constant 0 : index
    %c0_8 = arith.constant 0 : index
    %9 = vector.load %arg3[%c0_6, %c0_7, %c0_8] : memref<1x128x32xbf16, #tpu.memory_space<vmem>>, vector<1x128x32xbf16>
    %cst_9 = arith.constant dense<0.000000e+00> : vector<1x16x128xf32>
    %10 = tpu.matmul %8, %9, %cst_9 {dimension_numbers = #tpu.dot_dimension_numbers<[2], [2], [1], [1], [0, 0, 0, 1, 1, 1], [0], [0]>} : vector<1x16x32xbf16>, vector<1x128x32xbf16>, vector<1x16x128xf32> -> vector<1x16x128xf32>
    %c0_10 = arith.constant 0 : index
    %c0_11 = arith.constant 0 : index
    %11 = vector.load %arg6[%c0_10, %c0_11] : memref<1x128xf32, #tpu.memory_space<vmem>>, vector<1x128xf32>
    %12 = vector.shape_cast %11 : vector<1x128xf32> to vector<1x1x128xf32>
    %13 = vector.broadcast %12 : vector<1x1x128xf32> to vector<1x16x128xf32>
    %14 = arith.addf %10, %13 : vector<1x16x128xf32>
    %cst_12 = arith.constant dense<0xFF800000> : vector<1x16xf32>
    %15 = vector.multi_reduction <maximumf>, %14, %cst_12 [2] : vector<1x16x128xf32> to vector<1x16xf32>
    %16 = vector.shape_cast %15 : vector<1x16xf32> to vector<1x16x1xf32>
    %17 = vector.broadcast %16 : vector<1x16x1xf32> to vector<1x16x128xf32>
    %18 = arith.subf %14, %17 : vector<1x16x128xf32>
    %19 = math.exp %18 : vector<1x16x128xf32>
    %cst_13 = arith.constant dense<0.000000e+00> : vector<1x16xf32>
    %20 = vector.multi_reduction <add>, %19, %cst_13 [2] : vector<1x16x128xf32> to vector<1x16xf32>
    %21 = vector.shape_cast %20 : vector<1x16xf32> to vector<1x16x1xf32>
    %22 = tpu.reciprocal %21 {approx = true} : vector<1x16x1xf32> -> vector<1x16x1xf32>
    %23 = vector.broadcast %22 : vector<1x16x1xf32> to vector<1x16x128xf32>
    %24 = arith.mulf %19, %23 : vector<1x16x128xf32>
    %25 = vector.extract_strided_slice %24 {offsets = [0, 0, 0], sizes = [1, 16, 8], strides = [1, 1, 1]} : vector<1x16x128xf32> to vector<1x16x8xf32>
    %26 = arith.truncf %25 : vector<1x16x8xf32> to vector<1x16x8xbf16>
    %c0_14 = arith.constant 0 : index
    %c0_15 = arith.constant 0 : index
    %c0_16 = arith.constant 0 : index
    %27 = vector.load %arg7[%c0_14, %c0_15, %c0_16] : memref<1x16x8xbf16, #tpu.memory_space<vmem>>, vector<1x16x8xbf16>
    tpu.vector_store %arg7[%c0_14, %c0_15, %c0_16], %26 {strides = array<i32>} : memref<1x16x8xbf16, #tpu.memory_space<vmem>>, vector<1x16x8xbf16>,
    return
  }
  func.func @transform_0(%arg0: i32, %arg1: i32) -> (i32, i32, i32) {
    %c0_i32 = arith.constant 0 : i32
    %c0_i32_0 = arith.constant 0 : i32
    return %arg0, %arg1, %c0_i32 : i32, i32, i32
  }
  func.func @transform_1(%arg0: i32, %arg1: i32) -> (i32, i32, i32) {
    %c0_i32 = arith.constant 0 : i32
    %c0_i32_0 = arith.constant 0 : i32
    %c0_i32_1 = arith.constant 0 : i32
    return %arg0, %c0_i32, %c0_i32_0 : i32, i32, i32
  }
  func.func @transform_2(%arg0: i32, %arg1: i32) -> (i32, i32) {
    %c0_i32 = arith.constant 0 : i32
    %c0_i32_0 = arith.constant 0 : i32
    %c0_i32_1 = arith.constant 0 : i32
    return %c0_i32, %c0_i32_0 : i32, i32
  }
  func.func @transform_3(%arg0: i32, %arg1: i32) -> (i32, i32) {
    %c0_i32 = arith.constant 0 : i32
    %c0_i32_0 = arith.constant 0 : i32
    %c0_i32_1 = arith.constant 0 : i32
    return %c0_i32, %c0_i32_0 : i32, i32
  }
  func.func @transform_4(%arg0: i32, %arg1: i32) -> (i32, i32) {
    %c0_i32 = arith.constant 0 : i32
    %c0_i32_0 = arith.constant 0 : i32
    %c0_i32_1 = arith.constant 0 : i32
    return %c0_i32, %c0_i32_0 : i32, i32
  }
  func.func @transform_5(%arg0: i32, %arg1: i32) -> (i32, i32, i32) {
    %c0_i32 = arith.constant 0 : i32
    %c0_i32_0 = arith.constant 0 : i32
    return %arg0, %arg1, %c0_i32 : i32, i32, i32
  }
}

</mosaic_0001>

<llo_original>
// kernel: tpu_custom_call.1
$region0: #{tpu_custom_call.1}
  #allocation0 [shape = 'u32[]', space=smem, size = 0x4, offset = 0x4, fixed_abs, tag = 'smem constant byte address 0x4 - core index']
  #allocation1 [shape = 'u32[72,128]{1,0:T(1,128)}', space=vmem, size = 0x9000, scoped, tag = 'internal scratch']
  %s0 = inlined_call_operand.vmem [shape: bf16[2,16,32], index: 0, kind: input, shape index: {}]
  %s1 = inlined_call_operand.vmem [shape: bf16[2,128,32], index: 1, kind: input, shape index: {}]
  %s2 = inlined_call_operand.vmem [shape: bf16[32,32], index: 2, kind: input, shape index: {}]
  %s3 = inlined_call_operand.vmem [shape: f32[1,32], index: 3, kind: input, shape index: {}]
  %s4 = inlined_call_operand.vmem [shape: f32[1,128], index: 4, kind: input, shape index: {}]
  %s5 = inlined_call_operand.vmem [shape: bf16[2,16,8], index: 5, kind: output, shape index: {}]
  %s6 = sld [smem:[#allocation0]]
  $region53: #{tpu_custom_call.1} parent=0
    _
  %s8 = ssub.s32 1, %s6
  %s9 = scalar_select 0, %s8, %s6
  loop: start=0, step=1, limit=4
  $region2: #{tpu_custom_call.1} parent=0 // loop_pre_header
    _
  $region3: #{tpu_custom_call.1} parent=0 // loop_header
    %s11 = sphi 0, %s15
    %p12 = scmp.ge.s32.totalorder %s11, 4
    %s18 = sphi 0, %s30
    %s19 = sphi 0, %s26
    %s20 = sphi 0, %s18
    %s21 = sphi 0, %s19
    %s22 = sphi 0, %s20
    %s23 = sphi 0, %s21
    %s35 = sphi 0, %s37
    %s38 = sphi 0, %s35
    %s39 = sphi 0, %s38
    %s55 = sphi 0, %s39
    %s61 = sphi 0, %s63
    %s64 = sphi 0, %s61
    %s65 = sphi 0, %s64
    %s81 = sphi 0, %s65
    %s85 = sphi 0, %s85
    %s87 = sphi 0, %s85
    %s88 = sphi 0, %s87
    %s102 = sphi 0, %s88
    %s106 = sphi 0, %s106
    %s108 = sphi 0, %s106
    %s109 = sphi 0, %s108
    %s123 = sphi 0, %s109
    %s127 = sphi 0, %s127
    %s129 = sphi 0, %s127
    %s130 = sphi 0, %s129
    %s144 = sphi 0, %s130
    %s152 = sphi 0, %s154
    %s155 = sphi 0, %s152
    %s156 = sphi 0, %s155
    %s172 = sphi 0, %s156
  $region4: #{tpu_custom_call.1} parent=0 // loop_header_branch
    %14 = sbr.rel (%p12) target = $region8
  $region5: #{tpu_custom_call.1} parent=0 // loop_body
    %s16 = ssub.s32 %s11, 1
    %s17 = ssub.s32 %s11, 2
    %s24 = sadd.s32 1, %s19
    %p25 = scmp.ge.s32.totalorder %s24, 1
    %s26 = scalar_select %p25, 0, %s24
    %s27 = sadd.s32 1, %s18
    %s28 = scalar_select %p25, %s27, %s18
    %p29 = scmp.ge.s32.totalorder %s28, 2
    %s30 = scalar_select %p29, 0, %s28
    %s31 = ssub.s32 %s18, %s30
    %s32 = ssub.s32 %s19, %s26
    %s33 = sor.u32 %s31, %s32
    %p34 = scmp.eq.s32.totalorder %s33, 0
    %s36 = sadd.s32 %s35, 1
    %s37 = scalar_select %p34, %s35, %s36
    %p40 = pneg %p34
    %p41 = scmp.eq.s32.totalorder %s11, 1
    %p42 = por %p40, %p41
    %p43 = scmp.ne.s32.totalorder %s35, %s38
    %p44 = scmp.eq.s32.totalorder %s11, 0
    %p45 = por %p43, %p44
    %p46 = scmp.ne.s32.totalorder %s35, %s38
    %p47 = scmp.eq.s32.totalorder %s16, 1
    %p48 = por %p46, %p47
    %p49 = scmp.ne.s32.totalorder %s38, %s39
    %p50 = scmp.eq.s32.totalorder %s16, 0
    %p51 = por %p49, %p50
    %p52 = scmp.ne.s32.totalorder %s38, %s39
    %p53 = scmp.eq.s32.totalorder %s17, 1
    %p54 = por %p52, %p53
    %p56 = scmp.ne.s32.totalorder %s39, %s55
    %p57 = scmp.eq.s32.totalorder %s17, 0
    %p58 = por %p56, %p57
    %s59 = ssub.s32 %s18, %s30
    %p60 = scmp.eq.s32.totalorder %s59, 0
    %s62 = sadd.s32 %s61, 1
    %s63 = scalar_select %p60, %s61, %s62
    %p66 = pneg %p60
    %p67 = scmp.eq.s32.totalorder %s11, 1
    %p68 = por %p66, %p67
    %p69 = scmp.ne.s32.totalorder %s61, %s64
    %p70 = scmp.eq.s32.totalorder %s11, 0
    %p71 = por %p69, %p70
    %p72 = scmp.ne.s32.totalorder %s61, %s64
    %p73 = scmp.eq.s32.totalorder %s16, 1
    %p74 = por %p72, %p73
    %p75 = scmp.ne.s32.totalorder %s64, %s65
    %p76 = scmp.eq.s32.totalorder %s16, 0
    %p77 = por %p75, %p76
    %p78 = scmp.ne.s32.totalorder %s64, %s65
    %p79 = scmp.eq.s32.totalorder %s17, 1
    %p80 = por %p78, %p79
    %p82 = scmp.ne.s32.totalorder %s65, %s81
    %p83 = scmp.eq.s32.totalorder %s17, 0
    %p84 = por %p82, %p83
    %s86 = sadd.s32 %s85, 1
    %p89 = scmp.eq.s32.totalorder %s11, 1
    %p90 = scmp.ne.s32.totalorder %s85, %s87
    %p91 = scmp.eq.s32.totalorder %s11, 0
    %p92 = por %p90, %p91
    %p93 = scmp.ne.s32.totalorder %s85, %s87
    %p94 = scmp.eq.s32.totalorder %s16, 1
    %p95 = por %p93, %p94
    %p96 = scmp.ne.s32.totalorder %s87, %s88
    %p97 = scmp.eq.s32.totalorder %s16, 0
    %p98 = por %p96, %p97
    %p99 = scmp.ne.s32.totalorder %s87, %s88
    %p100 = scmp.eq.s32.totalorder %s17, 1
    %p101 = por %p99, %p100
    %p103 = scmp.ne.s32.totalorder %s88, %s102
    %p104 = scmp.eq.s32.totalorder %s17, 0
    %p105 = por %p103, %p104
    %s107 = sadd.s32 %s106, 1
    %p110 = scmp.eq.s32.totalorder %s11, 1
    %p111 = scmp.ne.s32.totalorder %s106, %s108
    %p112 = scmp.eq.s32.totalorder %s11, 0
    %p113 = por %p111, %p112
    %p114 = scmp.ne.s32.totalorder %s106, %s108
    %p115 = scmp.eq.s32.totalorder %s16, 1
    %p116 = por %p114, %p115
    %p117 = scmp.ne.s32.totalorder %s108, %s109
    %p118 = scmp.eq.s32.totalorder %s16, 0
    %p119 = por %p117, %p118
    %p120 = scmp.ne.s32.totalorder %s108, %s109
    %p121 = scmp.eq.s32.totalorder %s17, 1
    %p122 = por %p120, %p121
    %p124 = scmp.ne.s32.totalorder %s109, %s123
    %p125 = scmp.eq.s32.totalorder %s17, 0
    %p126 = por %p124, %p125
    %s128 = sadd.s32 %s127, 1
    %p131 = scmp.eq.s32.totalorder %s11, 1
    %p132 = scmp.ne.s32.totalorder %s127, %s129
    %p133 = scmp.eq.s32.totalorder %s11, 0
    %p134 = por %p132, %p133
    %p135 = scmp.ne.s32.totalorder %s127, %s129
    %p136 = scmp.eq.s32.totalorder %s16, 1
    %p137 = por %p135, %p136
    %p138 = scmp.ne.s32.totalorder %s129, %s130
    %p139 = scmp.eq.s32.totalorder %s16, 0
    %p140 = por %p138, %p139
    %p141 = scmp.ne.s32.totalorder %s129, %s130
    %p142 = scmp.eq.s32.totalorder %s17, 1
    %p143 = por %p141, %p142
    %p145 = scmp.ne.s32.totalorder %s130, %s144
    %p146 = scmp.eq.s32.totalorder %s17, 0
    %p147 = por %p145, %p146
    %s148 = ssub.s32 %s18, %s30
    %s149 = ssub.s32 %s19, %s26
    %s150 = sor.u32 %s148, %s149
    %p151 = scmp.eq.s32.totalorder %s150, 0
    %s153 = sadd.s32 %s152, 1
    %s154 = scalar_select %p151, %s152, %s153
    %p157 = pneg %p151
    %p158 = scmp.eq.s32.totalorder %s11, 1
    %p159 = por %p157, %p158
    %p160 = scmp.ne.s32.totalorder %s152, %s155
    %p161 = scmp.eq.s32.totalorder %s11, 0
    %p162 = por %p160, %p161
    %p163 = scmp.ne.s32.totalorder %s152, %s155
    %p164 = scmp.eq.s32.totalorder %s16, 1
    %p165 = por %p163, %p164
    %p166 = scmp.ne.s32.totalorder %s155, %s156
    %p167 = scmp.eq.s32.totalorder %s16, 0
    %p168 = por %p166, %p167
    %p169 = scmp.ne.s32.totalorder %s155, %s156
    %p170 = scmp.eq.s32.totalorder %s17, 1
    %p171 = por %p169, %p170
    %p173 = scmp.ne.s32.totalorder %s156, %s172
    %p174 = scmp.eq.s32.totalorder %s17, 0
    %p175 = por %p173, %p174
    %p176 = scmp.le.s32.totalorder 1, %s11
    %p177 = scmp.lt.s32.totalorder %s11, 3
    %p178 = pnand %p176, %p177
    %p179 = pneg %p178
    // Predicated region
    $region9: #{tpu_custom_call.1} parent=5 // pred_check
      _
    $region10: #{tpu_custom_call.1} parent=5 // pred_check_branch
      %181 = sbr.rel (%p178) target = $region12
    $region11: #{tpu_custom_call.1} parent=5 // pred_region
      %s182 = ssub.s32 %s11, 1
      // Predicated region
      $region13: #{tpu_custom_call.1} parent=11 // pred_check
        %p183 = pneg %p98
      $region14: #{tpu_custom_call.1} parent=11 // pred_check_branch
        %185 = sbr.rel (%p183) target = $region16
      $region15: #{tpu_custom_call.1} parent=11 // pred_region
        _
      $region16: #{tpu_custom_call.1} parent=11 // pred_fallthru
        _
      // Predicated region
      $region17: #{tpu_custom_call.1} parent=11 // pred_check
        %p186 = pneg %p119
      $region18: #{tpu_custom_call.1} parent=11 // pred_check_branch
        %188 = sbr.rel (%p186) target = $region20
      $region19: #{tpu_custom_call.1} parent=11 // pred_region
        _
      $region20: #{tpu_custom_call.1} parent=11 // pred_fallthru
        _
      // Predicated region
      $region21: #{tpu_custom_call.1} parent=11 // pred_check
        %p189 = pneg %p140
      $region22: #{tpu_custom_call.1} parent=11 // pred_check_branch
        %191 = sbr.rel (%p189) target = $region24
      $region23: #{tpu_custom_call.1} parent=11 // pred_region
        _
      $region24: #{tpu_custom_call.1} parent=11 // pred_fallthru
        _
    $region12: #{tpu_custom_call.1} parent=5 // pred_fallthru
      _
    %p192 = scmp.lt.s32.totalorder %s11, 2
    // Predicated region
    $region25: #{tpu_custom_call.1} parent=5 // pred_check
      %p193 = pneg %p192
    $region26: #{tpu_custom_call.1} parent=5 // pred_check_branch
      %195 = sbr.rel (%p193) target = $region28
    $region27: #{tpu_custom_call.1} parent=5 // pred_region
      // Predicated region
      $region29: #{tpu_custom_call.1} parent=27 // pred_check
        %p196 = pneg %p45
      $region30: #{tpu_custom_call.1} parent=27 // pred_check_branch
        %198 = sbr.rel (%p196) target = $region32
      $region31: #{tpu_custom_call.1} parent=27 // pred_region
        %s199 = smul.u32 2, %s19
        %p200 = scmp.lt.s32.totalorder %s18, 1
        %s201 = scalar_select %p200, %s18, 1
        %p202 = scmp.lt.s32.totalorder %s199, 1
        %s203 = scalar_select %p202, %s199, 1
        %s204 = smul.addr %s201, 2
        %s205 = sadd.s32 %s203, %s204
        %s206 = smul.addr %s205, 4
        %s207 = scalar_lea.vmem %s0, %s206
        %s208 = smul.u32 2, %s19
      $region32: #{tpu_custom_call.1} parent=27 // pred_fallthru
        _
      // Predicated region
      $region33: #{tpu_custom_call.1} parent=27 // pred_check
        %p209 = pneg %p71
      $region34: #{tpu_custom_call.1} parent=27 // pred_check_branch
        %211 = sbr.rel (%p209) target = $region36
      $region35: #{tpu_custom_call.1} parent=27 // pred_region
        %p212 = scmp.lt.s32.totalorder %s18, 1
        %s213 = scalar_select %p212, %s18, 1
        %s214 = smul.addr %s213, 16
        %s215 = smul.addr %s214, 4
        %s216 = scalar_lea.vmem %s1, %s215
      $region36: #{tpu_custom_call.1} parent=27 // pred_fallthru
        _
    $region28: #{tpu_custom_call.1} parent=5 // pred_fallthru
      _
    %p217 = scmp.le.s32.totalorder 1, %s11
    %p218 = scmp.lt.s32.totalorder %s11, 3
    %p219 = pnand %p217, %p218
    %p220 = pneg %p219
    // Predicated region
    $region37: #{tpu_custom_call.1} parent=5 // pred_check
      _
    $region38: #{tpu_custom_call.1} parent=5 // pred_check_branch
      %222 = sbr.rel (%p219) target = $region40
    $region39: #{tpu_custom_call.1} parent=5 // pred_region
      %s223 = ssub.s32 %s11, 1
      %s224 = smul.u32 2, %s21
      %p225 = scmp.lt.s32.totalorder %s20, 1
      %s226 = scalar_select %p225, %s20, 1
      %p227 = scmp.lt.s32.totalorder %s224, 1
      %s228 = scalar_select %p227, %s224, 1
      %s229 = smul.addr %s226, 2
      %s230 = sadd.s32 %s228, %s229
      %s231 = smul.addr %s230, 4
      %s232 = scalar_lea.vmem %s0, %s231
      %p233 = pneg %p51
      %p234 = pneg %p48
      %p235 = scmp.lt.s32.totalorder %s20, 1
      %s236 = scalar_select %p235, %s20, 1
      %s237 = smul.addr %s236, 16
      %s238 = smul.addr %s237, 4
      %s239 = scalar_lea.vmem %s1, %s238
      %p240 = pneg %p77
      %p241 = pneg %p74
      %p242 = pneg %p98
      %p243 = pneg %p95
      %p244 = pneg %p119
      %p245 = pneg %p116
      %p246 = pneg %p140
      %p247 = pneg %p137
      %p248 = pneg %p168
      %p249 = pneg %p165
      %s250 = smul.u32 2, %s21
      %p251 = scmp.lt.s32.totalorder %s20, 1
      %s252 = scalar_select %p251, %s20, 1
      %p253 = scmp.lt.s32.totalorder %s250, 1
      %s254 = scalar_select %p253, %s250, 1
      %s255 = smul.addr %s252, 2
      %s256 = sadd.s32 %s254, %s255
      %s257 = smul.addr %s256, 4
      %s258 = scalar_lea.vmem %s5, %s257
      %s259 = smul.u32 2, %s21
      %p260 = scmp.lt.s32.totalorder %s20, 1
      %s261 = scalar_select %p260, %s20, 1
      %p262 = scmp.lt.s32.totalorder %s259, 1
      %s263 = scalar_select %p262, %s259, 1
      %s264 = smul.addr %s261, 2
      %s265 = sadd.s32 %s263, %s264
      %s266 = smul.addr %s265, 4
      %s267 = scalar_lea.vmem %s0, %s266
      %s268 = smul.u32 2, %s21
      %p269 = scmp.lt.s32.totalorder %s20, 1
      %s270 = scalar_select %p269, %s20, 1
      %s271 = smul.addr %s270, 16
      %s272 = smul.addr %s271, 4
      %s273 = scalar_lea.vmem %s1, %s272
      %s274 = smul.u32 2, %s21
      %p275 = scmp.lt.s32.totalorder %s20, 1
      %s276 = scalar_select %p275, %s20, 1
      %p277 = scmp.lt.s32.totalorder %s274, 1
      %s278 = scalar_select %p277, %s274, 1
      %s279 = smul.addr %s276, 2
      %s280 = sadd.s32 %s278, %s279
      %s281 = smul.addr %s280, 4
      %s282 = scalar_lea.vmem %s5, %s281
      %s283 = smul.u32 2, %s21
      %v285 = vld [vmem:[%s267] sm:$0xf]
      %v286 = vld [vmem:[%s267 + $0x4] sm:$0xf]
      %v287 = vld [vmem:[%s2] sm:$0xf]
      %v288 = vld [vmem:[%s2 + $0x4] sm:$0xf]
      %v289 = vld [vmem:[%s2 + $0x8] sm:$0xf]
      %v290 = vld [vmem:[%s2 + $0xc] sm:$0xf]
      %v291 = vld [vmem:[%s3] sm:$0x1]
      %v293 = vperm.slane %v291, 0
      %v297 = vunpack.c.l.b16 %v285
      %v298 = vunpack.c.l.b16 %v286
      %v299 = vpack.c.b16 %v298, %v297
      %v304 = vunpack.c.l.b16 %v287
      %v305 = vunpack.c.l.b16 %v288
      %v306 = vunpack.c.l.b16 %v289
      %v307 = vunpack.c.l.b16 %v290
      %v308 = vpack.c.b16 %v305, %v304
      %v309 = vpack.c.b16 %v307, %v306
      %vm312 = vcmask 261120
      %v314 = vsel %vm312, %v299, 0
      %316 = vmatpush.bf16.msra.mxu0 0
      %317 = vmatpush.bf16.msra.mxu0 0
      %318 = vmatpush.bf16.msra.mxu0 0
      %319 = vmatpush.bf16.msra.mxu0 0
      %320 = vmatpush.bf16.msra.mxu0 0
      %321 = vmatpush.bf16.msra.mxu0 0
      %322 = vmatpush.bf16.msra.mxu0 %v309
      %323 = vmatpush.bf16.msra.mxu0 %v308
      %324 = vmatmul.bf16.gmra.mxu0 %v314
      %v325 = vpop.f32.mrf.mxu0
      %v326 = vadd.f32 %v293, %v325
      %v327 = vpop.f32.mrf.mxu0
      %v328 = vadd.f32 %v293, %v327
      %329 = vdwg.mxu0
      %v330 = vpack.c.bf16 %v326, %v326
      %v331 = vpack.c.bf16 %v328, %v328
      %v332 = vld [vmem:[%s273] sm:$0xf]
      %v333 = vld [vmem:[%s273 + $0x4] sm:$0xf]
      %v334 = vld [vmem:[%s273 + $0x8] sm:$0xf]
      %v335 = vld [vmem:[%s273 + $0xc] sm:$0xf]
      %v336 = vld [vmem:[%s273 + $0x10] sm:$0xf]
      %v337 = vld [vmem:[%s273 + $0x14] sm:$0xf]
      %v338 = vld [vmem:[%s273 + $0x18] sm:$0xf]
      %v339 = vld [vmem:[%s273 + $0x1c] sm:$0xf]
      %v340 = vld [vmem:[%s273 + $0x20] sm:$0xf]
      %v341 = vld [vmem:[%s273 + $0x24] sm:$0xf]
      %v342 = vld [vmem:[%s273 + $0x28] sm:$0xf]
      %v343 = vld [vmem:[%s273 + $0x2c] sm:$0xf]
      %v344 = vld [vmem:[%s273 + $0x30] sm:$0xf]
      %v345 = vld [vmem:[%s273 + $0x34] sm:$0xf]
      %v346 = vld [vmem:[%s273 + $0x38] sm:$0xf]
      %v347 = vld [vmem:[%s273 + $0x3c] sm:$0xf]
      %v348 = vld [vmem:[%s4] sm:$0x1]
      %v350 = vperm.slane %v348, 0
      %v354 = vunpack.c.l.b16 %v330
      %v355 = vunpack.c.l.b16 %v331
      %v356 = vpack.c.b16 %v355, %v354
      %v373 = vunpack.c.l.b16 %v332
      %v374 = vunpack.c.l.b16 %v333
      %v375 = vunpack.c.l.b16 %v334
      %v376 = vunpack.c.l.b16 %v335
      %v377 = vunpack.c.l.b16 %v336
      %v378 = vunpack.c.l.b16 %v337
      %v379 = vunpack.c.l.b16 %v338
      %v380 = vunpack.c.l.b16 %v339
      %v381 = vunpack.c.l.b16 %v340
      %v382 = vunpack.c.l.b16 %v341
      %v383 = vunpack.c.l.b16 %v342
      %v384 = vunpack.c.l.b16 %v343
      %v385 = vunpack.c.l.b16 %v344
      %v386 = vunpack.c.l.b16 %v345
      %v387 = vunpack.c.l.b16 %v346
      %v388 = vunpack.c.l.b16 %v347
      %v389 = vpack.c.b16 %v374, %v373
      %v390 = vpack.c.b16 %v376, %v375
      %v391 = vpack.c.b16 %v378, %v377
      %v392 = vpack.c.b16 %v380, %v379
      %v393 = vpack.c.b16 %v382, %v381
      %v394 = vpack.c.b16 %v384, %v383
      %v395 = vpack.c.b16 %v386, %v385
      %v396 = vpack.c.b16 %v388, %v387
      %v398 = vsel %vm312, %v356, 0
      %v401 = vsel %vm312, %v389, 0
      %v404 = vsel %vm312, %v390, 0
      %v407 = vsel %vm312, %v391, 0
      %v410 = vsel %vm312, %v392, 0
      %v413 = vsel %vm312, %v393, 0
      %v416 = vsel %vm312, %v394, 0
      %v419 = vsel %vm312, %v395, 0
      %v422 = vsel %vm312, %v396, 0
      %424 = vmatpush.bf16.xpose.msra.mxu0 %v422
      %425 = vmatpush.bf16.xpose.msra.mxu0 %v419
      %426 = vmatpush.bf16.xpose.msra.mxu0 %v416
      %427 = vmatpush.bf16.xpose.msra.mxu0 %v413
      %428 = vmatpush.bf16.xpose.msra.mxu0 %v410
      %429 = vmatpush.bf16.xpose.msra.mxu0 %v407
      %430 = vmatpush.bf16.xpose.msra.mxu0 %v404
      %431 = vmatpush.bf16.xpose.msra.mxu0 %v401
      %432 = vmatmul.bf16.gmra.mxu0 %v398
      %v433 = vpop.f32.mrf.mxu0
      %v434 = vadd.f32 %v350, %v433
      %v435 = vpop.f32.mrf.mxu0
      %v436 = vadd.f32 %v350, %v435
      %437 = vdwg.mxu0
      %438 = vmax.xlane.f32.xlu0 %v434
      %v439 = vpop.xlane.xlu0 %438
      %440 = vmax.xlane.f32.xlu0 %v436
      %v441 = vpop.xlane.xlu0 %440
      %v442 = vsub.f32 %v434, %v439
      %v443 = vsub.f32 %v436, %v441
      %v444 = vmul.f32 %v442, 1.442695
      %v445 = vpow.pop %v444
      %v446 = vmul.f32 %v443, 1.442695
      %v447 = vpow.pop %v446
      %448 = vadd.xlane.f32.xlu0 %v445
      %v449 = vpop.xlane.xlu0 %448
      %450 = vadd.xlane.f32.xlu0 %v447
      %v451 = vpop.xlane.xlu0 %450
      %v452 = vrcp.pop %v449
      %v453 = vrcp.pop %v451
      %v454 = vmul.f32 %v445, %v452
      %v455 = vmul.f32 %v447, %v453
      %v456 = vpack.c.bf16 %v454, %v454
      %v457 = vpack.c.bf16 %v455, %v455
      %vm458 = vcmask 60416
      %459 = vst.msk [vmem:[%s282] sm:$0xf] %vm458, %v456
      %460 = vst.msk [vmem:[%s282 + $0x4] sm:$0xf] %vm458, %v457
      %s461 = smul.u32 2, %s21
      %p462 = scmp.lt.s32.totalorder %s20, 1
      %s463 = scalar_select %p462, %s20, 1
      %p464 = scmp.lt.s32.totalorder %s461, 1
      %s465 = scalar_select %p464, %s461, 1
      %s466 = smul.addr %s463, 2
      %s467 = sadd.s32 %s465, %s466
      %s468 = smul.addr %s467, 4
      %s469 = scalar_lea.vmem %s5, %s468
      // Predicated region
      $region41: #{tpu_custom_call.1} parent=39 // pred_check
        %p470 = pneg %p165
      $region42: #{tpu_custom_call.1} parent=39 // pred_check_branch
        %472 = sbr.rel (%p470) target = $region44
      $region43: #{tpu_custom_call.1} parent=39 // pred_region
        %s473 = smul.u32 2, %s21
      $region44: #{tpu_custom_call.1} parent=39 // pred_fallthru
        _
    $region40: #{tpu_custom_call.1} parent=5 // pred_fallthru
      _
    %p474 = scmp.le.s32.totalorder 2, %s11
    // Predicated region
    $region45: #{tpu_custom_call.1} parent=5 // pred_check
      %p475 = pneg %p474
    $region46: #{tpu_custom_call.1} parent=5 // pred_check_branch
      %477 = sbr.rel (%p475) target = $region48
    $region47: #{tpu_custom_call.1} parent=5 // pred_region
      %s478 = ssub.s32 %s11, 2
      // Predicated region
      $region49: #{tpu_custom_call.1} parent=47 // pred_check
        %p479 = pneg %p171
      $region50: #{tpu_custom_call.1} parent=47 // pred_check_branch
        %481 = sbr.rel (%p479) target = $region52
      $region51: #{tpu_custom_call.1} parent=47 // pred_region
        %s482 = smul.u32 2, %s23
        %p483 = scmp.lt.s32.totalorder %s22, 1
        %s484 = scalar_select %p483, %s22, 1
        %p485 = scmp.lt.s32.totalorder %s482, 1
        %s486 = scalar_select %p485, %s482, 1
        %s487 = smul.addr %s484, 2
        %s488 = sadd.s32 %s486, %s487
        %s489 = smul.addr %s488, 4
        %s490 = scalar_lea.vmem %s5, %s489
      $region52: #{tpu_custom_call.1} parent=47 // pred_fallthru
        _
    $region48: #{tpu_custom_call.1} parent=5 // pred_fallthru
      _
  $region6: #{tpu_custom_call.1} parent=0 // loop_footer
    %s15 = sadd.s32 1, %s11
  $region7: #{tpu_custom_call.1} parent=0 // loop_footer_branch
    %10 = sbr.rel target = $region3
  $region8: #{tpu_custom_call.1} parent=0 // loop_exit
    _

</llo_original>
